<compile_context>
chip_gen: v7x
topology: tpu7x:2x2x1
jax: 0.10.0
libtpu: 0.0.40
codegen_flags: <defaults>
</compile_context>

<pallas_src>
import functools

import jax
import jax.numpy as jnp
from jax.experimental import pallas as pl
from jax.experimental.pallas import tpu as pltpu


def _gat_kernel(xf_ref, adj_ref, wt_ref, wb_ref, ap_ref, ab_ref, out_ref,
                *, batch, n_nodes, alpha, concat, mxu_dtype):
    # Fused Linear over the flattened batch: one MXU matmul for all B*N rows.
    # h = x @ W^T + b (nn.Linear semantics; W^T pre-built in the wrapper, bias in f32).
    h_flat = jnp.dot(xf_ref[...], wt_ref[...],
                     preferred_element_type=jnp.float32) + wb_ref[...]      # (B*N, F_out) f32

    # Both attention projections in one matmul:
    #   s[:, 0] = h . a_left,  s[:, 1] = h . a_right
    s = jnp.dot(h_flat.astype(mxu_dtype), ap_ref[...],
                preferred_element_type=jnp.float32)                         # (B*N, 2)

    ab = ab_ref[0]                      # scalar attention bias, read from SMEM

    # Static unroll: batch is tiny here.
    # TODO(synk): at production B make this a grid axis (live ranges + adj pipelining).
    for b in range(batch):
        lo = b * n_nodes
        h = h_flat[lo:lo + n_nodes, :]          # (N, F_out) f32
        f1 = s[lo:lo + n_nodes, 0:1]            # (N, 1)
        f2 = s[lo:lo + n_nodes, 1:2]            # (N, 1)

        # e[i, j] = leakyrelu(h_i . a_left + h_j . a_right + a_bias)
        e = f1 + jnp.transpose(f2) + ab                          # (N, N)
        e = jnp.maximum(e, alpha * e)                            # LeakyReLU, 0 < alpha < 1

        # Mask non-edges with a very negative number (matches the torch reference).
        adj_f = adj_ref[b].astype(jnp.float32)                   # int8 -> f32 widen
        e = jnp.where(adj_f > 0.0, e, jnp.full_like(e, -9.0e15))

        # Softmax over neighbors j; normalization applied AFTER the output matmul.
        m = jnp.max(e, axis=-1, keepdims=True)
        p = jnp.exp(e - m)                                       # (N, N), masked -> 0
        l = jnp.sum(p, axis=-1, keepdims=True)                   # (N, 1), always >= 1
        # TODO(synk): F.dropout on attention is identity in eval mode (training=False).

        # Unnormalized aggregation on the MXU, then scale the small (N, F_out) result.
        h_prime = jnp.dot(p.astype(mxu_dtype), h.astype(mxu_dtype),
                          preferred_element_type=jnp.float32)    # (N, F_out)
        r = pl.reciprocal(l, approx=True)
        r = r * (2.0 - l * r)                                    # one Newton step
        h_prime = h_prime * r

        if concat:
            # ELU (alpha=1.0, the F.elu default).
            # TODO(synk): switch to jnp.expm1 once Mosaic coverage is confirmed
            # (exp(x)-1 near 0 loses ~1e-7 abs, well inside the budget).
            h_prime = jnp.where(h_prime > 0, h_prime, jnp.exp(h_prime) - 1.0)

        out_ref[b] = h_prime.astype(out_ref.dtype)


def graph_attention_layer(x, adj, params, *, alpha=0.2, concat=True,
                          use_bf16_mxu=False):
    """x: (B, N, F_in) f32, adj: (B, N, N). Returns (B, N, F_out) f32."""
    B, N, f_in = x.shape
    w, wb, a, ab = params
    f_out = w.shape[0]

    cdt = jnp.bfloat16 if use_bf16_mxu else jnp.float32

    # One-time parameter massaging OUTSIDE the kernel (grid-invariant work):
    w_t = jnp.transpose(w).astype(cdt)                               # (F_in, F_out)
    wb2 = wb.reshape(1, f_out).astype(jnp.float32)                   # (1, F_out)
    a_pair = jnp.stack([a[0, :f_out], a[0, f_out:]], axis=1).astype(cdt)  # (F_out, 2)
    ab1 = ab.reshape(1).astype(jnp.float32)                          # (1,) -> SMEM
    x_flat = x.reshape(B * N, f_in).astype(cdt)                      # fused-batch Linear operand
    adj_i8 = (adj > 0).astype(jnp.int8)                              # 4x less adj HBM traffic

    kernel = functools.partial(_gat_kernel, batch=B, n_nodes=N, alpha=alpha,
                               concat=concat, mxu_dtype=cdt)

    return pl.pallas_call(
        kernel,
        out_shape=jax.ShapeDtypeStruct((B, N, f_out), jnp.float32),
        grid=(1,),   # single invocation: whole problem fits comfortably in VMEM
        in_specs=[
            pl.BlockSpec((B * N, f_in), lambda i: (0, 0)),           # x (flattened)
            pl.BlockSpec((B, N, N), lambda i: (0, 0, 0)),            # adj (int8 mask)
            pl.BlockSpec((f_in, f_out), lambda i: (0, 0)),           # W^T
            pl.BlockSpec((1, f_out), lambda i: (0, 0)),              # W bias
            pl.BlockSpec((f_out, 2), lambda i: (0, 0)),              # [a_left | a_right]
            pl.BlockSpec(memory_space=pltpu.MemorySpace.SMEM),       # a bias (scalar)
        ],
        out_specs=pl.BlockSpec((B, N, f_out), lambda i: (0, 0, 0)),
        compiler_params=pltpu.CompilerParams(
            dimension_semantics=("arbitrary",)),
    )(x_flat, adj_i8, w_t, wb2, a_pair, ab1)


def _reference(x, adj, params, *, alpha=0.2, concat=True):
    """Pure-JAX reference mirroring the PyTorch forward (eval mode)."""
    w, wb, a, ab = params
    f_out = w.shape[0]
    h = jnp.einsum("bni,oi->bno", x, w) + wb                 # (B, N, F_out)
    a_left = a[0, :f_out]
    a_right = a[0, f_out:]
    e = (h @ a_left)[:, :, None] + (h @ a_right)[:, None, :] + ab[0]
    e = jnp.where(e > 0, e, alpha * e)
    e = jnp.where(adj > 0, e, -9.0e15)
    att = jax.nn.softmax(e, axis=2)
    hp = jnp.einsum("bij,bjf->bif", att, h)
    return jax.nn.elu(hp) if concat else hp


if __name__ == "__main__":
    key = jax.random.PRNGKey(0)
    # F_OUT = 128 keeps the output last dim lane-dense (unmasked stores); for
    # narrower F_out fuse heads along the lane axis (single-head module here).
    B, N, F_IN, F_OUT = 2, 16, 64, 128
    ALPHA = 0.2

    k1, k2, k3, k4, k5, k6 = jax.random.split(key, 6)
    x = jax.random.normal(k1, (B, N, F_IN), dtype=jnp.float32)
    # random sparse-ish adjacency with self-loops
    adj = (jax.random.uniform(k2, (B, N, N)) > 0.6).astype(jnp.float32)
    adj = jnp.maximum(adj, jnp.eye(N, dtype=jnp.float32)[None])

    # Deterministic parameter init (Linear-like scales)
    w = jax.random.uniform(k3, (F_OUT, F_IN), minval=-1.0, maxval=1.0) / jnp.sqrt(F_IN)
    wb = jax.random.uniform(k4, (F_OUT,), minval=-1.0, maxval=1.0) / jnp.sqrt(F_IN)
    a = jax.random.uniform(k5, (1, 2 * F_OUT), minval=-1.0, maxval=1.0) / jnp.sqrt(2 * F_OUT)
    ab = jax.random.uniform(k6, (1,), minval=-1.0, maxval=1.0) / jnp.sqrt(2 * F_OUT)
    params = (w.astype(jnp.float32), wb.astype(jnp.float32),
              a.astype(jnp.float32), ab.astype(jnp.float32))

    ref = _reference(x, adj, params, alpha=ALPHA, concat=True)

    # Exact (f32 MXU) path: must match the reference to 1e-4.
    out = graph_attention_layer(x, adj, params, alpha=ALPHA, concat=True,
                                use_bf16_mxu=False)
    out = jax.block_until_ready(out)
    assert out.shape == (B, N, F_OUT)
    assert jnp.allclose(out, ref, atol=1e-4, rtol=1e-4), \
        float(jnp.max(jnp.abs(out - ref)))

    # Fast (bf16 MXU) path: looser tolerance, verifies the production-precision route.
    out_bf16 = graph_attention_layer(x, adj, params, alpha=ALPHA, concat=True,
                                     use_bf16_mxu=True)
    out_bf16 = jax.block_until_ready(out_bf16)
    assert jnp.allclose(out_bf16, ref, atol=5e-2, rtol=5e-2), \
        float(jnp.max(jnp.abs(out_bf16 - ref)))

    print("KERNEL_OK")
</pallas_src>

<mosaic_0001>
module attributes {stable_mosaic.version = 11 : i64} {
  func.func @_gat_kernel(%arg0: i32, %arg1: memref<32x64xf32, #tpu.memory_space<vmem>>, %arg2: memref<2x16x16xi8, #tpu.memory_space<vmem>>, %arg3: memref<64x128xf32, #tpu.memory_space<vmem>>, %arg4: memref<1x128xf32, #tpu.memory_space<vmem>>, %arg5: memref<128x2xf32, #tpu.memory_space<vmem>>, %arg6: memref<1xf32, #tpu.memory_space<smem>>, %arg7: memref<2x16x128xf32, #tpu.memory_space<vmem>>) attributes {dimension_semantics = [#tpu.dimension_semantics<arbitrary>], iteration_bounds = array<i64: 1>, scalar_prefetch = 0 : i64, scratch_operands = 0 : i64, tpu.core_type = #tpu.core_type<tc>, window_params = [{pipeline_mode = #tpu.pipeline_mode<synchronous>, transform_indices = @transform_0, window_bounds = array<i64: 32, 64>}, {pipeline_mode = #tpu.pipeline_mode<synchronous>, transform_indices = @transform_1, window_bounds = array<i64: 2, 16, 16>}, {pipeline_mode = #tpu.pipeline_mode<synchronous>, transform_indices = @transform_2, window_bounds = array<i64: 64, 128>}, {pipeline_mode = #tpu.pipeline_mode<synchronous>, transform_indices = @transform_3, window_bounds = array<i64: 1, 128>}, {pipeline_mode = #tpu.pipeline_mode<synchronous>, transform_indices = @transform_4, window_bounds = array<i64: 128, 2>}, {transform_indices = @transform_5, window_bounds = array<i64: 1>}, {pipeline_mode = #tpu.pipeline_mode<synchronous>, transform_indices = @transform_6, window_bounds = array<i64: 2, 16, 128>}]} {
    %c0 = arith.constant 0 : index
    %c0_0 = arith.constant 0 : index
    %0 = vector.load %arg1[%c0, %c0_0] : memref<32x64xf32, #tpu.memory_space<vmem>>, vector<32x64xf32>
    %c0_1 = arith.constant 0 : index
    %c0_2 = arith.constant 0 : index
    %1 = vector.load %arg3[%c0_1, %c0_2] : memref<64x128xf32, #tpu.memory_space<vmem>>, vector<64x128xf32>
    %cst = arith.constant dense<0.000000e+00> : vector<32x128xf32>
    %2 = tpu.matmul %0, %1, %cst {dimension_numbers = #tpu.dot_dimension_numbers<[1], [0], [0], [1], [0, 0, 1, 1], [], []>} : vector<32x64xf32>, vector<64x128xf32>, vector<32x128xf32> -> vector<32x128xf32>
    %c0_3 = arith.constant 0 : index
    %c0_4 = arith.constant 0 : index
    %3 = vector.load %arg4[%c0_3, %c0_4] : memref<1x128xf32, #tpu.memory_space<vmem>>, vector<1x128xf32>
    %4 = vector.broadcast %3 : vector<1x128xf32> to vector<32x128xf32>
    %5 = arith.addf %2, %4 : vector<32x128xf32>
    %c0_5 = arith.constant 0 : index
    %c0_6 = arith.constant 0 : index
    %6 = vector.load %arg5[%c0_5, %c0_6] : memref<128x2xf32, #tpu.memory_space<vmem>>, vector<128x2xf32>
    %cst_7 = arith.constant dense<0.000000e+00> : vector<32x2xf32>
    %7 = tpu.matmul %5, %6, %cst_7 {dimension_numbers = #tpu.dot_dimension_numbers<[1], [0], [0], [1], [0, 0, 1, 1], [], []>} : vector<32x128xf32>, vector<128x2xf32>, vector<32x2xf32> -> vector<32x2xf32>
    %c0_8 = arith.constant 0 : index
    %8 = memref.load %arg6[%c0_8] : memref<1xf32, #tpu.memory_space<smem>>
    %9 = vector.extract_strided_slice %5 {offsets = [0, 0], sizes = [16, 128], strides = [1, 1]} : vector<32x128xf32> to vector<16x128xf32>
    %10 = vector.extract_strided_slice %7 {offsets = [0, 0], sizes = [16, 1], strides = [1, 1]} : vector<32x2xf32> to vector<16x1xf32>
    %11 = vector.extract_strided_slice %7 {offsets = [0, 1], sizes = [16, 1], strides = [1, 1]} : vector<32x2xf32> to vector<16x1xf32>
    %12 = tpu.transpose %11, [1, 0] : vector<16x1xf32> -> vector<1x16xf32>
    %13 = vector.broadcast %10 : vector<16x1xf32> to vector<16x16xf32>
    %14 = vector.broadcast %12 : vector<1x16xf32> to vector<16x16xf32>
    %15 = arith.addf %13, %14 : vector<16x16xf32>
    %16 = vector.broadcast %8 : f32 to vector<16x16xf32>
    %17 = arith.addf %15, %16 : vector<16x16xf32>
    %cst_9 = arith.constant 2.000000e-01 : f32
    %18 = vector.broadcast %cst_9 : f32 to vector<16x16xf32>
    %19 = arith.mulf %18, %17 : vector<16x16xf32>
    %20 = arith.maximumf %17, %19 : vector<16x16xf32>
    %c0_10 = arith.constant 0 : index
    %c0_11 = arith.constant 0 : index
    %c0_12 = arith.constant 0 : index
    %21 = vector.load %arg2[%c0_10, %c0_11, %c0_12] : memref<2x16x16xi8, #tpu.memory_space<vmem>>, vector<1x16x16xi8>
    %22 = vector.shape_cast %21 : vector<1x16x16xi8> to vector<16x16xi8>
    %23 = arith.sitofp %22 : vector<16x16xi8> to vector<16x16xf32>
    %cst_13 = arith.constant 0.000000e+00 : f32
    %24 = vector.broadcast %cst_13 : f32 to vector<16x16xf32>
    %25 = arith.cmpf ogt, %23, %24 : vector<16x16xf32>
    %cst_14 = arith.constant -9.000000e+15 : f32
    %26 = vector.broadcast %cst_14 : f32 to vector<16x16xf32>
    %27 = arith.select %25, %20, %26 : vector<16x16xi1>, vector<16x16xf32>
    %cst_15 = arith.constant dense<0xFF800000> : vector<16xf32>
    %28 = vector.multi_reduction <maximumf>, %27, %cst_15 [1] : vector<16x16xf32> to vector<16xf32>
    %29 = vector.shape_cast %28 : vector<16xf32> to vector<16x1xf32>
    %30 = vector.broadcast %29 : vector<16x1xf32> to vector<16x16xf32>
    %31 = arith.subf %27, %30 : vector<16x16xf32>
    %32 = math.exp %31 : vector<16x16xf32>
    %cst_16 = arith.constant dense<0.000000e+00> : vector<16xf32>
    %33 = vector.multi_reduction <add>, %32, %cst_16 [1] : vector<16x16xf32> to vector<16xf32>
    %34 = vector.shape_cast %33 : vector<16xf32> to vector<16x1xf32>
    %cst_17 = arith.constant dense<0.000000e+00> : vector<16x128xf32>
    %35 = tpu.matmul %32, %9, %cst_17 {dimension_numbers = #tpu.dot_dimension_numbers<[1], [0], [0], [1], [0, 0, 1, 1], [], []>} : vector<16x16xf32>, vector<16x128xf32>, vector<16x128xf32> -> vector<16x128xf32>
    %36 = tpu.reciprocal %34 {approx = true} : vector<16x1xf32> -> vector<16x1xf32>
    %37 = arith.mulf %34, %36 : vector<16x1xf32>
    %cst_18 = arith.constant 2.000000e+00 : f32
    %38 = vector.broadcast %cst_18 : f32 to vector<16x1xf32>
    %39 = arith.subf %38, %37 : vector<16x1xf32>
    %40 = arith.mulf %36, %39 : vector<16x1xf32>
    %41 = vector.broadcast %40 : vector<16x1xf32> to vector<16x128xf32>
    %42 = arith.mulf %35, %41 : vector<16x128xf32>
    %cst_19 = arith.constant 0.000000e+00 : f32
    %43 = vector.broadcast %cst_19 : f32 to vector<16x128xf32>
    %44 = arith.cmpf ogt, %42, %43 : vector<16x128xf32>
    %45 = math.exp %42 : vector<16x128xf32>
    %cst_20 = arith.constant 1.000000e+00 : f32
    %46 = vector.broadcast %cst_20 : f32 to vector<16x128xf32>
    %47 = arith.subf %45, %46 : vector<16x128xf32>
    %48 = arith.select %44, %42, %47 : vector<16x128xi1>, vector<16x128xf32>
    %c0_21 = arith.constant 0 : index
    %c0_22 = arith.constant 0 : index
    %c0_23 = arith.constant 0 : index
    %49 = vector.load %arg7[%c0_21, %c0_22, %c0_23] : memref<2x16x128xf32, #tpu.memory_space<vmem>>, vector<1x16x128xf32>
    %50 = vector.shape_cast %49 : vector<1x16x128xf32> to vector<16x128xf32>
    %51 = vector.shape_cast %48 : vector<16x128xf32> to vector<1x16x128xf32>
    tpu.vector_store %arg7[%c0_21, %c0_22, %c0_23], %51 {strides = array<i32>} : memref<2x16x128xf32, #tpu.memory_space<vmem>>, vector<1x16x128xf32>,
    %52 = vector.extract_strided_slice %5 {offsets = [16, 0], sizes = [16, 128], strides = [1, 1]} : vector<32x128xf32> to vector<16x128xf32>
    %53 = vector.extract_strided_slice %7 {offsets = [16, 0], sizes = [16, 1], strides = [1, 1]} : vector<32x2xf32> to vector<16x1xf32>
    %54 = vector.extract_strided_slice %7 {offsets = [16, 1], sizes = [16, 1], strides = [1, 1]} : vector<32x2xf32> to vector<16x1xf32>
    %55 = tpu.transpose %54, [1, 0] : vector<16x1xf32> -> vector<1x16xf32>
    %56 = vector.broadcast %53 : vector<16x1xf32> to vector<16x16xf32>
    %57 = vector.broadcast %55 : vector<1x16xf32> to vector<16x16xf32>
    %58 = arith.addf %56, %57 : vector<16x16xf32>
    %59 = vector.broadcast %8 : f32 to vector<16x16xf32>
    %60 = arith.addf %58, %59 : vector<16x16xf32>
    %cst_24 = arith.constant 2.000000e-01 : f32
    %61 = vector.broadcast %cst_24 : f32 to vector<16x16xf32>
    %62 = arith.mulf %61, %60 : vector<16x16xf32>
    %63 = arith.maximumf %60, %62 : vector<16x16xf32>
    %c1 = arith.constant 1 : index
    %c0_25 = arith.constant 0 : index
    %c0_26 = arith.constant 0 : index
    %64 = vector.load %arg2[%c1, %c0_25, %c0_26] : memref<2x16x16xi8, #tpu.memory_space<vmem>>, vector<1x16x16xi8>
    %65 = vector.shape_cast %64 : vector<1x16x16xi8> to vector<16x16xi8>
    %66 = arith.sitofp %65 : vector<16x16xi8> to vector<16x16xf32>
    %cst_27 = arith.constant 0.000000e+00 : f32
    %67 = vector.broadcast %cst_27 : f32 to vector<16x16xf32>
    %68 = arith.cmpf ogt, %66, %67 : vector<16x16xf32>
    %cst_28 = arith.constant -9.000000e+15 : f32
    %69 = vector.broadcast %cst_28 : f32 to vector<16x16xf32>
    %70 = arith.select %68, %63, %69 : vector<16x16xi1>, vector<16x16xf32>
    %cst_29 = arith.constant dense<0xFF800000> : vector<16xf32>
    %71 = vector.multi_reduction <maximumf>, %70, %cst_29 [1] : vector<16x16xf32> to vector<16xf32>
    %72 = vector.shape_cast %71 : vector<16xf32> to vector<16x1xf32>
    %73 = vector.broadcast %72 : vector<16x1xf32> to vector<16x16xf32>
    %74 = arith.subf %70, %73 : vector<16x16xf32>
    %75 = math.exp %74 : vector<16x16xf32>
    %cst_30 = arith.constant dense<0.000000e+00> : vector<16xf32>
    %76 = vector.multi_reduction <add>, %75, %cst_30 [1] : vector<16x16xf32> to vector<16xf32>
    %77 = vector.shape_cast %76 : vector<16xf32> to vector<16x1xf32>
    %cst_31 = arith.constant dense<0.000000e+00> : vector<16x128xf32>
    %78 = tpu.matmul %75, %52, %cst_31 {dimension_numbers = #tpu.dot_dimension_numbers<[1], [0], [0], [1], [0, 0, 1, 1], [], []>} : vector<16x16xf32>, vector<16x128xf32>, vector<16x128xf32> -> vector<16x128xf32>
    %79 = tpu.reciprocal %77 {approx = true} : vector<16x1xf32> -> vector<16x1xf32>
    %80 = arith.mulf %77, %79 : vector<16x1xf32>
    %cst_32 = arith.constant 2.000000e+00 : f32
    %81 = vector.broadcast %cst_32 : f32 to vector<16x1xf32>
    %82 = arith.subf %81, %80 : vector<16x1xf32>
    %83 = arith.mulf %79, %82 : vector<16x1xf32>
    %84 = vector.broadcast %83 : vector<16x1xf32> to vector<16x128xf32>
    %85 = arith.mulf %78, %84 : vector<16x128xf32>
    %cst_33 = arith.constant 0.000000e+00 : f32
    %86 = vector.broadcast %cst_33 : f32 to vector<16x128xf32>
    %87 = arith.cmpf ogt, %85, %86 : vector<16x128xf32>
    %88 = math.exp %85 : vector<16x128xf32>
    %cst_34 = arith.constant 1.000000e+00 : f32
    %89 = vector.broadcast %cst_34 : f32 to vector<16x128xf32>
    %90 = arith.subf %88, %89 : vector<16x128xf32>
    %91 = arith.select %87, %85, %90 : vector<16x128xi1>, vector<16x128xf32>
    %c1_35 = arith.constant 1 : index
    %c0_36 = arith.constant 0 : index
    %c0_37 = arith.constant 0 : index
    %92 = vector.load %arg7[%c1_35, %c0_36, %c0_37] : memref<2x16x128xf32, #tpu.memory_space<vmem>>, vector<1x16x128xf32>
    %93 = vector.shape_cast %92 : vector<1x16x128xf32> to vector<16x128xf32>
    %94 = vector.shape_cast %91 : vector<16x128xf32> to vector<1x16x128xf32>
    tpu.vector_store %arg7[%c1_35, %c0_36, %c0_37], %94 {strides = array<i32>} : memref<2x16x128xf32, #tpu.memory_space<vmem>>, vector<1x16x128xf32>,
    return
  }
  func.func @transform_0(%arg0: i32) -> (i32, i32) {
    %c0_i32 = arith.constant 0 : i32
    %c0_i32_0 = arith.constant 0 : i32
    %c0_i32_1 = arith.constant 0 : i32
    return %c0_i32, %c0_i32_0 : i32, i32
  }
  func.func @transform_1(%arg0: i32) -> (i32, i32, i32) {
    %c0_i32 = arith.constant 0 : i32
    %c0_i32_0 = arith.constant 0 : i32
    %c0_i32_1 = arith.constant 0 : i32
    %c0_i32_2 = arith.constant 0 : i32
    return %c0_i32, %c0_i32_0, %c0_i32_1 : i32, i32, i32
  }
  func.func @transform_2(%arg0: i32) -> (i32, i32) {
    %c0_i32 = arith.constant 0 : i32
    %c0_i32_0 = arith.constant 0 : i32
    %c0_i32_1 = arith.constant 0 : i32
    return %c0_i32, %c0_i32_0 : i32, i32
  }
  func.func @transform_3(%arg0: i32) -> (i32, i32) {
    %c0_i32 = arith.constant 0 : i32
    %c0_i32_0 = arith.constant 0 : i32
    %c0_i32_1 = arith.constant 0 : i32
    return %c0_i32, %c0_i32_0 : i32, i32
  }
  func.func @transform_4(%arg0: i32) -> (i32, i32) {
    %c0_i32 = arith.constant 0 : i32
    %c0_i32_0 = arith.constant 0 : i32
    %c0_i32_1 = arith.constant 0 : i32
    return %c0_i32, %c0_i32_0 : i32, i32
  }
  func.func @transform_5(%arg0: i32) -> i32 {
    %c0_i32 = arith.constant 0 : i32
    %c0_i32_0 = arith.constant 0 : i32
    return %c0_i32 : i32
  }
  func.func @transform_6(%arg0: i32) -> (i32, i32, i32) {
    %c0_i32 = arith.constant 0 : i32
    %c0_i32_0 = arith.constant 0 : i32
    %c0_i32_1 = arith.constant 0 : i32
    %c0_i32_2 = arith.constant 0 : i32
    return %c0_i32, %c0_i32_0, %c0_i32_1 : i32, i32, i32
  }
}

</mosaic_0001>

<llo_original>
// kernel: tpu_custom_call.1
$region0: #{tpu_custom_call.1}
  #allocation0 [shape = 'u32[]', space=smem, size = 0x4, offset = 0x4, fixed_abs, tag = 'smem constant byte address 0x4 - core index']
  #allocation1 [shape = 'u32[144,128]{1,0:T(1,128)}', space=vmem, size = 0x12000, scoped, tag = 'internal scratch']
  #allocation2 [shape = 'f32[1]{0:T(128)S(6)}', space=smem, size = 0x200, scoped, tag = 'scoped memory for tpu_custom_call.1']
  %s0 = inlined_call_operand.vmem [shape: f32[32,64], index: 0, kind: input, shape index: {}]
  %s1 = inlined_call_operand.vmem [shape: s8[2,16,16], index: 1, kind: input, shape index: {}]
  %s2 = inlined_call_operand.vmem [shape: f32[64,128], index: 2, kind: input, shape index: {}]
  %s3 = inlined_call_operand.vmem [shape: f32[1,128], index: 3, kind: input, shape index: {}]
  %s4 = inlined_call_operand.vmem [shape: f32[128,2], index: 4, kind: input, shape index: {}]
  %s5 = inlined_call_operand.<no memory space> [shape: f32[1], index: 5, kind: input, shape index: {}]
  %s6 = inlined_call_operand.hbm [shape: f32[2,16,128], index: 6, kind: output, shape index: {}]
  %s7 = sld [smem:[#allocation0]]
  $region34: #{tpu_custom_call.1} parent=0
    _
  %s9 = ssub.s32 1, %s7
  %s10 = scalar_select 0, %s9, %s7
  %11 = sst [smem:[#allocation2]] %s5
  $region1: #{tpu_custom_call.1} parent=0
    #allocation3 [shape = 'u8[16384]{0}', space=vmem, size = 0x4000, scoped, tag = 'output window, operand 0, single buffered']
    #allocation4 [shape = 's32[1]{0}', space=sflag, size = 0x4, scoped, tag = 'scoped memory for tpu_custom_call.1']
    %12 = vsyncpa [#allocation4], 0
    // Predicated region
    $region2: #{tpu_custom_call.1} parent=1 // pred_check
      _
    $region3: #{tpu_custom_call.1} parent=1 // pred_check_branch
      %14 = sbr.rel (0) target = $region5
    $region4: #{tpu_custom_call.1} parent=1 // pred_region
      _
    $region5: #{tpu_custom_call.1} parent=1 // pred_fallthru
      _
    // Predicated region
    $region6: #{tpu_custom_call.1} parent=1 // pred_check
      _
    $region7: #{tpu_custom_call.1} parent=1 // pred_check_branch
      %16 = sbr.rel (0) target = $region9
    $region8: #{tpu_custom_call.1} parent=1 // pred_region
      _
    $region9: #{tpu_custom_call.1} parent=1 // pred_fallthru
      _
    // Predicated region
    $region10: #{tpu_custom_call.1} parent=1 // pred_check
      _
    $region11: #{tpu_custom_call.1} parent=1 // pred_check_branch
      %18 = sbr.rel (0) target = $region13
    $region12: #{tpu_custom_call.1} parent=1 // pred_region
      _
    $region13: #{tpu_custom_call.1} parent=1 // pred_fallthru
      _
    // Predicated region
    $region14: #{tpu_custom_call.1} parent=1 // pred_check
      _
    $region15: #{tpu_custom_call.1} parent=1 // pred_check_branch
      %20 = sbr.rel (0) target = $region17
    $region16: #{tpu_custom_call.1} parent=1 // pred_region
      _
    $region17: #{tpu_custom_call.1} parent=1 // pred_fallthru
      _
    // Predicated region
    $region18: #{tpu_custom_call.1} parent=1 // pred_check
      _
    $region19: #{tpu_custom_call.1} parent=1 // pred_check_branch
      %22 = sbr.rel (0) target = $region21
    $region20: #{tpu_custom_call.1} parent=1 // pred_region
      _
    $region21: #{tpu_custom_call.1} parent=1 // pred_fallthru
      _
    // Predicated region
    $region22: #{tpu_custom_call.1} parent=1 // pred_check
      _
    $region23: #{tpu_custom_call.1} parent=1 // pred_check_branch
      %24 = sbr.rel (0) target = $region25
    $region24: #{tpu_custom_call.1} parent=1 // pred_region
      _
    $region25: #{tpu_custom_call.1} parent=1 // pred_fallthru
      _
    %v25 = vld [vmem:[%s0] sm:$0xff]
    %v26 = vld [vmem:[%s0 + $0x8] sm:$0xff]
    %v27 = vld [vmem:[%s0 + $0x10] sm:$0xff]
    %v28 = vld [vmem:[%s0 + $0x18] sm:$0xff]
    %v29 = vld [vmem:[%s2] sm:$0xff]
    %v30 = vld [vmem:[%s2 + $0x8] sm:$0xff]
    %v31 = vld [vmem:[%s2 + $0x10] sm:$0xff]
    %v32 = vld [vmem:[%s2 + $0x18] sm:$0xff]
    %v33 = vld [vmem:[%s2 + $0x20] sm:$0xff]
    %v34 = vld [vmem:[%s2 + $0x28] sm:$0xff]
    %v35 = vld [vmem:[%s2 + $0x30] sm:$0xff]
    %v36 = vld [vmem:[%s2 + $0x38] sm:$0xff]
    %v37 = vld [vmem:[%s3] sm:$0x1]
    %v39 = vlaneseq
    %v40 = vshrl.u32 %v39, 7
    %v41 = vsub.s32 0, %v40
    %v42 = vrot.slane %v37, %v41
    %vm44 = vcmask 523264
    %v46 = vsel %vm44, %v25, 0
    %v49 = vsel %vm44, %v26, 0
    %v52 = vsel %vm44, %v27, 0
    %v55 = vsel %vm44, %v28, 0
    %57 = vmatprep.subr.mxu0 0.0
    %58 = vmatpush1.msra.mxu0 %v29
    %59 = vmatprep.subr.mxu0 0.0
    %60 = vmatpush1.msra.mxu0 %v30
    %61 = vmatprep.subr.mxu0 0.0
    %62 = vmatpush1.msra.mxu0 %v31
    %63 = vmatprep.subr.mxu0 0.0
    %64 = vmatpush1.msra.mxu0 %v32
    %65 = vmatprep.subr.mxu0 0.0
    %66 = vmatpush1.msra.mxu0 %v33
    %67 = vmatprep.subr.mxu0 0.0
    %68 = vmatpush1.msra.mxu0 %v34
    %69 = vmatprep.subr.mxu0 0.0
    %70 = vmatpush1.msra.mxu0 %v35
    %71 = vmatprep.subr.mxu0 0.0
    %72 = vmatpush1.msra.mxu0 %v36
    %73 = vmatprep.subr.mxu0 0.0
    %74 = vmatpush1.msra.mxu0 0.0
    %75 = vmatprep.subr.mxu0 0.0
    %76 = vmatpush1.msra.mxu0 0.0
    %77 = vmatprep.subr.mxu0 0.0
    %78 = vmatpush1.msra.mxu0 0.0
    %79 = vmatprep.subr.mxu0 0.0
    %80 = vmatpush1.msra.mxu0 0.0
    %81 = vmatprep.subr.mxu0 0.0
    %82 = vmatpush1.msra.mxu0 0.0
    %83 = vmatprep.subr.mxu0 0.0
    %84 = vmatpush1.msra.mxu0 0.0
    %85 = vmatprep.subr.mxu0 0.0
    %86 = vmatpush1.msra.mxu0 0.0
    %87 = vmatprep.subr.mxu0 0.0
    %88 = vmatpush1.msra.mxu0 0.0
    %89 = vmatprep.subr.mxu0 0.0
    %90 = vmatpush1.msra.mxu0 0.0
    %91 = vmatprep.subr.mxu0 0.0
    %92 = vmatpush1.msra.mxu0 0.0
    %93 = vmatprep.subr.mxu0 0.0
    %94 = vmatpush1.msra.mxu0 0.0
    %95 = vmatprep.subr.mxu0 0.0
    %96 = vmatpush1.msra.mxu0 0.0
    %97 = vmatprep.subr.mxu0 0.0
    %98 = vmatpush1.msra.mxu0 0.0
    %99 = vmatprep.subr.mxu0 0.0
    %100 = vmatpush1.msra.mxu0 0.0
    %101 = vmatprep.subr.mxu0 0.0
    %102 = vmatpush1.msra.mxu0 0.0
    %103 = vmatprep.subr.mxu0 0.0
    %104 = vmatpush1.msra.mxu0 0.0
    %105 = vmatprep.subr.mxu0 0.0
    %106 = vmatpush1.msra.mxu0 0.0
    %107 = vmatprep.subr.mxu0 0.0
    %108 = vmatpush1.msra.mxu0 0.0
    %109 = vmatprep.subr.mxu0 0.0
    %110 = vmatpush1.msra.mxu0 0.0
    %111 = vmatprep.subr.mxu0 0.0
    %112 = vmatpush1.msra.mxu0 0.0
    %113 = vmatprep.subr.mxu0 0.0
    %114 = vmatpush1.msra.mxu0 0.0
    %115 = vmatprep.subr.mxu0 0.0
    %116 = vmatpush1.msra.mxu0 0.0
    %117 = vmatprep.subr.mxu0 0.0
    %118 = vmatpush1.msra.mxu0 0.0
    %119 = vmatprep.subr.mxu0 0.0
    %120 = vmatpush1.msra.mxu0 0.0
    %121 = vmatprep.mubr.f32.mxu0 0.0
    %122 = vmatmul.mubr.f32.gmra.mrb[0].mxu0 %v46
    %v123 = vpop.f32.mrb[0].mxu0
    %v124 = vadd.f32 %v42, %v123
    %v125 = vpop.f32.mrb[0].mxu0
    %126 = vmatprep.mubr.f32.mxu0 0.0
    %127 = vmatmul.mubr.f32.gmra.mrb[0].mxu0 %v49
    %v128 = vpop.f32.mrb[0].mxu0
    %v129 = vadd.f32 %v42, %v128
    %v130 = vpop.f32.mrb[0].mxu0
    %131 = vmatprep.mubr.f32.mxu0 0.0
    %132 = vmatmul.mubr.f32.gmra.mrb[0].mxu0 %v52
    %v133 = vpop.f32.mrb[0].mxu0
    %v134 = vadd.f32 %v42, %v133
    %v135 = vpop.f32.mrb[0].mxu0
    %136 = vmatprep.mubr.f32.mxu0 0.0
    %137 = vmatmul.mubr.f32.gmra.mrb[0].mxu0 %v55
    %v138 = vpop.f32.mrb[0].mxu0
    %v139 = vadd.f32 %v42, %v138
    %v140 = vpop.f32.mrb[0].mxu0
    %141 = vdwg.mxu0
    %v142 = vld [vmem:[%s4] sm:$0xff]
    %v143 = vld [vmem:[%s4 + $0x8] sm:$0xff]
    %v144 = vld [vmem:[%s4 + $0x10] sm:$0xff]
    %v145 = vld [vmem:[%s4 + $0x18] sm:$0xff]
    %v146 = vld [vmem:[%s4 + $0x20] sm:$0xff]
    %v147 = vld [vmem:[%s4 + $0x28] sm:$0xff]
    %v148 = vld [vmem:[%s4 + $0x30] sm:$0xff]
    %v149 = vld [vmem:[%s4 + $0x38] sm:$0xff]
    %v150 = vld [vmem:[%s4 + $0x40] sm:$0xff]
    %v151 = vld [vmem:[%s4 + $0x48] sm:$0xff]
    %v152 = vld [vmem:[%s4 + $0x50] sm:$0xff]
    %v153 = vld [vmem:[%s4 + $0x58] sm:$0xff]
    %v154 = vld [vmem:[%s4 + $0x60] sm:$0xff]
    %v155 = vld [vmem:[%s4 + $0x68] sm:$0xff]
    %v156 = vld [vmem:[%s4 + $0x70] sm:$0xff]
    %v157 = vld [vmem:[%s4 + $0x78] sm:$0xff]
    %158 = vmatprep.subr.mxu0 0.0
    %159 = vmatpush1.msra.mxu0 %v142
    %160 = vmatprep.subr.mxu0 0.0
    %161 = vmatpush1.msra.mxu0 %v143
    %162 = vmatprep.subr.mxu0 0.0
    %163 = vmatpush1.msra.mxu0 %v144
    %164 = vmatprep.subr.mxu0 0.0
    %165 = vmatpush1.msra.mxu0 %v145
    %166 = vmatprep.subr.mxu0 0.0
    %167 = vmatpush1.msra.mxu0 %v146
    %168 = vmatprep.subr.mxu0 0.0
    %169 = vmatpush1.msra.mxu0 %v147
    %170 = vmatprep.subr.mxu0 0.0
    %171 = vmatpush1.msra.mxu0 %v148
    %172 = vmatprep.subr.mxu0 0.0
    %173 = vmatpush1.msra.mxu0 %v149
    %174 = vmatprep.subr.mxu0 0.0
    %175 = vmatpush1.msra.mxu0 %v150
    %176 = vmatprep.subr.mxu0 0.0
    %177 = vmatpush1.msra.mxu0 %v151
    %178 = vmatprep.subr.mxu0 0.0
    %179 = vmatpush1.msra.mxu0 %v152
    %180 = vmatprep.subr.mxu0 0.0
    %181 = vmatpush1.msra.mxu0 %v153
    %182 = vmatprep.subr.mxu0 0.0
    %183 = vmatpush1.msra.mxu0 %v154
    %184 = vmatprep.subr.mxu0 0.0
    %185 = vmatpush1.msra.mxu0 %v155
    %186 = vmatprep.subr.mxu0 0.0
    %187 = vmatpush1.msra.mxu0 %v156
    %188 = vmatprep.subr.mxu0 0.0
    %189 = vmatpush1.msra.mxu0 %v157
    %190 = vmatprep.subr.mxu0 0.0
    %191 = vmatpush1.msra.mxu0 0.0
    %192 = vmatprep.subr.mxu0 0.0
    %193 = vmatpush1.msra.mxu0 0.0
    %194 = vmatprep.subr.mxu0 0.0
    %195 = vmatpush1.msra.mxu0 0.0
    %196 = vmatprep.subr.mxu0 0.0
    %197 = vmatpush1.msra.mxu0 0.0
    %198 = vmatprep.subr.mxu0 0.0
    %199 = vmatpush1.msra.mxu0 0.0
    %200 = vmatprep.subr.mxu0 0.0
    %201 = vmatpush1.msra.mxu0 0.0
    %202 = vmatprep.subr.mxu0 0.0
    %203 = vmatpush1.msra.mxu0 0.0
    %204 = vmatprep.subr.mxu0 0.0
    %205 = vmatpush1.msra.mxu0 0.0
    %206 = vmatprep.subr.mxu0 0.0
    %207 = vmatpush1.msra.mxu0 0.0
    %208 = vmatprep.subr.mxu0 0.0
    %209 = vmatpush1.msra.mxu0 0.0
    %210 = vmatprep.subr.mxu0 0.0
    %211 = vmatpush1.msra.mxu0 0.0
    %212 = vmatprep.subr.mxu0 0.0
    %213 = vmatpush1.msra.mxu0 0.0
    %214 = vmatprep.subr.mxu0 0.0
    %215 = vmatpush1.msra.mxu0 0.0
    %216 = vmatprep.subr.mxu0 0.0
    %217 = vmatpush1.msra.mxu0 0.0
    %218 = vmatprep.subr.mxu0 0.0
    %219 = vmatpush1.msra.mxu0 0.0
    %220 = vmatprep.subr.mxu0 0.0
    %221 = vmatpush1.msra.mxu0 0.0
    %222 = vmatprep.mubr.f32.mxu0 0.0
    %223 = vmatmul.mubr.f32.gmra.mrb[0].mxu0 %v124
    %v224 = vpop.f32.mrb[0].mxu0
    %v225 = vadd.f32 0.0, %v224
    %v226 = vpop.f32.mrb[0].mxu0
    %227 = vmatprep.mubr.f32.mxu0 0.0
    %228 = vmatmul.mubr.f32.gmra.mrb[0].mxu0 %v129
    %v229 = vpop.f32.mrb[0].mxu0
    %v230 = vadd.f32 0.0, %v229
    %v231 = vpop.f32.mrb[0].mxu0
    %232 = vmatprep.mubr.f32.mxu0 0.0
    %233 = vmatmul.mubr.f32.gmra.mrb[0].mxu0 %v134
    %v234 = vpop.f32.mrb[0].mxu0
    %v235 = vadd.f32 0.0, %v234
    %v236 = vpop.f32.mrb[0].mxu0
    %237 = vmatprep.mubr.f32.mxu0 0.0
    %238 = vmatmul.mubr.f32.gmra.mrb[0].mxu0 %v139
    %v239 = vpop.f32.mrb[0].mxu0
    %v240 = vadd.f32 0.0, %v239
    %v241 = vpop.f32.mrb[0].mxu0
    %242 = vdwg.mxu0
    %s243 = sld [smem:[#allocation2]]
    %246 = vrot.lane.b32.xlu0 %v225, 127
    %v247 = vpop.permute.xlu0 %246
    %248 = vrot.lane.b32.xlu0 %v230, 127
    %v249 = vpop.permute.xlu0 %248
    %252 = vxpose.xlu0.b32.start [1/16] %v247, 128
    %253 = vxpose.xlu0.b32.cont [2/16] %v249, 128
    %254 = vxpose.xlu0.b32.cont [3/16] 0.0, 128
    %255 = vxpose.xlu0.b32.cont [4/16] 0.0, 128
    %256 = vxpose.xlu0.b32.cont [5/16] 0.0, 128
    %257 = vxpose.xlu0.b32.cont [6/16] 0.0, 128
    %258 = vxpose.xlu0.b32.cont [7/16] 0.0, 128
    %259 = vxpose.xlu0.b32.cont [8/16] 0.0, 128
    %260 = vxpose.xlu0.b32.cont [9/16] 0.0, 128
    %261 = vxpose.xlu0.b32.cont [10/16] 0.0, 128
    %262 = vxpose.xlu0.b32.cont [11/16] 0.0, 128
    %263 = vxpose.xlu0.b32.cont [12/16] 0.0, 128
    %264 = vxpose.xlu0.b32.cont [13/16] 0.0, 128
    %265 = vxpose.xlu0.b32.cont [14/16] 0.0, 128
    %266 = vxpose.xlu0.b32.cont [15/16] 0.0, 128
    %267 = vxpose.xlu0.b32.end [16/16] 0.0, 128
    %v268 = vpop.trf.xlu0
    %v269 = vpop.trf.xlu0
    %v270 = vpop.trf.xlu0
    %v271 = vpop.trf.xlu0
    %v272 = vpop.trf.xlu0
    %v273 = vpop.trf.xlu0
    %v274 = vpop.trf.xlu0
    %v275 = vpop.trf.xlu0
    %v276 = vpop.trf.xlu0
    %v277 = vpop.trf.xlu0
    %v278 = vpop.trf.xlu0
    %v279 = vpop.trf.xlu0
    %v280 = vpop.trf.xlu0
    %v281 = vpop.trf.xlu0
    %v282 = vpop.trf.xlu0
    %v283 = vpop.trf.xlu0
    %284 = vset.pattern.permute.xlu0 0
    %285 = vperm.xlu0 %284, %v225
    %v286 = vpop.permute.xlu0 %285
    %288 = vset.pattern.permute.xlu0 0
    %289 = vperm.xlu0 %288, %v230
    %v290 = vpop.permute.xlu0 %289
    %v292 = vlaneseq
    %v293 = vshrl.u32 %v292, 7
    %v294 = vsub.s32 0, %v293
    %v295 = vrot.slane %v268, %v294
    %v296 = vadd.f32 %v286, %v295
    %v297 = vadd.f32 %v290, %v295
    %v298 = vstv %s243
    %v299 = vadd.f32 %v296, %v298
    %v300 = vadd.f32 %v297, %v298
    %v301 = vmul.f32 %v299, 0.2
    %v302 = vmul.f32 %v300, 0.2
    %v303 = vmax.f32 %v299, %v301
    %v304 = vmax.f32 %v300, %v302
    %v305 = vld [vmem:[%s1] sm:$0x3]
    %v306 = vld [vmem:[%s1 + $0x2] sm:$0x3]
    %v307 = vunpack.c.0.s8 %v305
    %v308 = vunpack.c.0.s8 %v306
    %v309 = vcvt.s32.f32 %v307
    %v310 = vcvt.s32.f32 %v308
    %vm311 = vcmp.gt.f32.partialorder %v309, 0.0
    %vm312 = vcmp.gt.f32.partialorder %v310, 0.0
    %v313 = vsel %vm311, %v303, -9e+15
    %v314 = vsel %vm312, %v304, -9e+15
    %vm315 = vcmask 130048
    %v316 = vsel %vm315, %v313, -inf
    %317 = vmax.xlane.f32.xlu0 %v316
    %v318 = vpop.xlane.xlu0 %317
    %v319 = vsel %vm315, %v314, -inf
    %320 = vmax.xlane.f32.xlu0 %v319
    %v321 = vpop.xlane.xlu0 %320
    %v322 = vsub.f32 %v313, %v318
    %v323 = vsub.f32 %v314, %v321
    %v324 = vmul.f32 %v322, 1.442695
    %v325 = vpow.pop %v324
    %v326 = vmul.f32 %v323, 1.442695
    %v327 = vpow.pop %v326
    %v328 = vsel %vm315, %v325, 0.0
    %329 = vadd.xlane.f32.xlu0 %v328
    %v330 = vpop.xlane.xlu0 %329
    %v331 = vsel %vm315, %v327, 0.0
    %332 = vadd.xlane.f32.xlu0 %v331
    %v333 = vpop.xlane.xlu0 %332
    %v335 = vsel %vm315, %v325, 0
    %v338 = vsel %vm315, %v327, 0
    %340 = vmatprep.subr.mxu0 0.0
    %341 = vmatpush1.msra.mxu0 %v124
    %342 = vmatprep.subr.mxu0 0.0
    %343 = vmatpush1.msra.mxu0 %v129
    %344 = vmatprep.subr.mxu0 0.0
    %345 = vmatpush1.msra.mxu0 0.0
    %346 = vmatprep.subr.mxu0 0.0
    %347 = vmatpush1.msra.mxu0 0.0
    %348 = vmatprep.subr.mxu0 0.0
    %349 = vmatpush1.msra.mxu0 0.0
    %350 = vmatprep.subr.mxu0 0.0
    %351 = vmatpush1.msra.mxu0 0.0
    %352 = vmatprep.subr.mxu0 0.0
    %353 = vmatpush1.msra.mxu0 0.0
    %354 = vmatprep.subr.mxu0 0.0
    %355 = vmatpush1.msra.mxu0 0.0
    %356 = vmatprep.subr.mxu0 0.0
    %357 = vmatpush1.msra.mxu0 0.0
    %358 = vmatprep.subr.mxu0 0.0
    %359 = vmatpush1.msra.mxu0 0.0
    %360 = vmatprep.subr.mxu0 0.0
    %361 = vmatpush1.msra.mxu0 0.0
    %362 = vmatprep.subr.mxu0 0.0
    %363 = vmatpush1.msra.mxu0 0.0
    %364 = vmatprep.subr.mxu0 0.0
    %365 = vmatpush1.msra.mxu0 0.0
    %366 = vmatprep.subr.mxu0 0.0
    %367 = vmatpush1.msra.mxu0 0.0
    %368 = vmatprep.subr.mxu0 0.0
    %369 = vmatpush1.msra.mxu0 0.0
    %370 = vmatprep.subr.mxu0 0.0
    %371 = vmatpush1.msra.mxu0 0.0
    %372 = vmatprep.subr.mxu0 0.0
    %373 = vmatpush1.msra.mxu0 0.0
    %374 = vmatprep.subr.mxu0 0.0
    %375 = vmatpush1.msra.mxu0 0.0
    %376 = vmatprep.subr.mxu0 0.0
    %377 = vmatpush1.msra.mxu0 0.0
    %378 = vmatprep.subr.mxu0 0.0
    %379 = vmatpush1.msra.mxu0 0.0
    %380 = vmatprep.subr.mxu0 0.0
    %381 = vmatpush1.msra.mxu0 0.0
    %382 = vmatprep.subr.mxu0 0.0
    %383 = vmatpush1.msra.mxu0 0.0
    %384 = vmatprep.subr.mxu0 0.0
    %385 = vmatpush1.msra.mxu0 0.0
    %386 = vmatprep.subr.mxu0 0.0
    %387 = vmatpush1.msra.mxu0 0.0
    %388 = vmatprep.subr.mxu0 0.0
    %389 = vmatpush1.msra.mxu0 0.0
    %390 = vmatprep.subr.mxu0 0.0
    %391 = vmatpush1.msra.mxu0 0.0
    %392 = vmatprep.subr.mxu0 0.0
    %393 = vmatpush1.msra.mxu0 0.0
    %394 = vmatprep.subr.mxu0 0.0
    %395 = vmatpush1.msra.mxu0 0.0
    %396 = vmatprep.subr.mxu0 0.0
    %397 = vmatpush1.msra.mxu0 0.0
    %398 = vmatprep.subr.mxu0 0.0
    %399 = vmatpush1.msra.mxu0 0.0
    %400 = vmatprep.subr.mxu0 0.0
    %401 = vmatpush1.msra.mxu0 0.0
    %402 = vmatprep.subr.mxu0 0.0
    %403 = vmatpush1.msra.mxu0 0.0
    %404 = vmatprep.mubr.f32.mxu0 0.0
    %405 = vmatmul.mubr.f32.gmra.mrb[0].mxu0 %v335
    %v406 = vpop.f32.mrb[0].mxu0
    %v407 = vadd.f32 0.0, %v406
    %v408 = vpop.f32.mrb[0].mxu0
    %409 = vmatprep.mubr.f32.mxu0 0.0
    %410 = vmatmul.mubr.f32.gmra.mrb[0].mxu0 %v338
    %v411 = vpop.f32.mrb[0].mxu0
    %v412 = vadd.f32 0.0, %v411
    %v413 = vpop.f32.mrb[0].mxu0
    %414 = vdwg.mxu0
    %v415 = vrcp.pop %v330
    %v416 = vrcp.pop %v333
    %v417 = vmul.f32 %v330, %v415
    %v418 = vmul.f32 %v333, %v416
    %v419 = vsub.f32 2.0, %v417
    %v420 = vsub.f32 2.0, %v418
    %v421 = vmul.f32 %v415, %v419
    %v422 = vmul.f32 %v416, %v420
    %v423 = vmul.f32 %v407, %v421
    %v424 = vmul.f32 %v412, %v422
    %vm425 = vcmp.gt.f32.partialorder %v423, 0.0
    %vm426 = vcmp.gt.f32.partialorder %v424, 0.0
    %v427 = vmul.f32 %v423, 1.442695
    %v428 = vpow.pop %v427
    %v429 = vmul.f32 %v424, 1.442695
    %v430 = vpow.pop %v429
    %v431 = vsub.f32 %v428, 1.0
    %v432 = vsub.f32 %v430, 1.0
    %v433 = vsel %vm425, %v423, %v431
    %v434 = vsel %vm426, %v424, %v432
    %435 = vst [vmem:[#allocation3] sm:$0xff] %v433
    %436 = vst [vmem:[#allocation3 + $0x8] sm:$0xff] %v434
    %439 = vrot.lane.b32.xlu0 %v235, 127
    %v440 = vpop.permute.xlu0 %439
    %441 = vrot.lane.b32.xlu0 %v240, 127
    %v442 = vpop.permute.xlu0 %441
    %445 = vxpose.xlu0.b32.start [1/16] %v440, 128
    %446 = vxpose.xlu0.b32.cont [2/16] %v442, 128
    %447 = vxpose.xlu0.b32.cont [3/16] 0.0, 128
    %448 = vxpose.xlu0.b32.cont [4/16] 0.0, 128
    %449 = vxpose.xlu0.b32.cont [5/16] 0.0, 128
    %450 = vxpose.xlu0.b32.cont [6/16] 0.0, 128
    %451 = vxpose.xlu0.b32.cont [7/16] 0.0, 128
    %452 = vxpose.xlu0.b32.cont [8/16] 0.0, 128
    %453 = vxpose.xlu0.b32.cont [9/16] 0.0, 128
    %454 = vxpose.xlu0.b32.cont [10/16] 0.0, 128
    %455 = vxpose.xlu0.b32.cont [11/16] 0.0, 128
    %456 = vxpose.xlu0.b32.cont [12/16] 0.0, 128
    %457 = vxpose.xlu0.b32.cont [13/16] 0.0, 128
    %458 = vxpose.xlu0.b32.cont [14/16] 0.0, 128
    %459 = vxpose.xlu0.b32.cont [15/16] 0.0, 128
    %460 = vxpose.xlu0.b32.end [16/16] 0.0, 128
    %v461 = vpop.trf.xlu0
    %v462 = vpop.trf.xlu0
    %v463 = vpop.trf.xlu0
    %v464 = vpop.trf.xlu0
    %v465 = vpop.trf.xlu0
    %v466 = vpop.trf.xlu0
    %v467 = vpop.trf.xlu0
    %v468 = vpop.trf.xlu0
    %v469 = vpop.trf.xlu0
    %v470 = vpop.trf.xlu0
    %v471 = vpop.trf.xlu0
    %v472 = vpop.trf.xlu0
    %v473 = vpop.trf.xlu0
    %v474 = vpop.trf.xlu0
    %v475 = vpop.trf.xlu0
    %v476 = vpop.trf.xlu0
    %477 = vset.pattern.permute.xlu0 0
    %478 = vperm.xlu0 %477, %v235
    %v479 = vpop.permute.xlu0 %478
    %481 = vset.pattern.permute.xlu0 0
    %482 = vperm.xlu0 %481, %v240
    %v483 = vpop.permute.xlu0 %482
    %v485 = vlaneseq
    %v486 = vshrl.u32 %v485, 7
    %v487 = vsub.s32 0, %v486
    %v488 = vrot.slane %v461, %v487
    %v489 = vadd.f32 %v479, %v488
    %v490 = vadd.f32 %v483, %v488
    %v491 = vadd.f32 %v489, %v298
    %v492 = vadd.f32 %v490, %v298
    %v493 = vmul.f32 %v491, 0.2
    %v494 = vmul.f32 %v492, 0.2
    %v495 = vmax.f32 %v491, %v493
    %v496 = vmax.f32 %v492, %v494
    %s497 = scalar_lea.vmem %s1, 4
    %v498 = vld [vmem:[%s497] sm:$0x3]
    %v499 = vld [vmem:[%s497 + $0x2] sm:$0x3]
    %v500 = vunpack.c.0.s8 %v498
    %v501 = vunpack.c.0.s8 %v499
    %v502 = vcvt.s32.f32 %v500
    %v503 = vcvt.s32.f32 %v501
    %vm504 = vcmp.gt.f32.partialorder %v502, 0.0
    %vm505 = vcmp.gt.f32.partialorder %v503, 0.0
    %v506 = vsel %vm504, %v495, -9e+15
    %v507 = vsel %vm505, %v496, -9e+15
    %v508 = vsel %vm315, %v506, -inf
    %509 = vmax.xlane.f32.xlu0 %v508
    %v510 = vpop.xlane.xlu0 %509
    %v511 = vsel %vm315, %v507, -inf
    %512 = vmax.xlane.f32.xlu0 %v511
    %v513 = vpop.xlane.xlu0 %512
    %v514 = vsub.f32 %v506, %v510
    %v515 = vsub.f32 %v507, %v513
    %v516 = vmul.f32 %v514, 1.442695
    %v517 = vpow.pop %v516
    %v518 = vmul.f32 %v515, 1.442695
    %v519 = vpow.pop %v518
    %v520 = vsel %vm315, %v517, 0.0
    %521 = vadd.xlane.f32.xlu0 %v520
    %v522 = vpop.xlane.xlu0 %521
    %v523 = vsel %vm315, %v519, 0.0
    %524 = vadd.xlane.f32.xlu0 %v523
    %v525 = vpop.xlane.xlu0 %524
    %v527 = vsel %vm315, %v517, 0
    %v530 = vsel %vm315, %v519, 0
    %532 = vmatprep.subr.mxu0 0.0
    %533 = vmatpush1.msra.mxu0 %v134
    %534 = vmatprep.subr.mxu0 0.0
    %535 = vmatpush1.msra.mxu0 %v139
    %536 = vmatprep.subr.mxu0 0.0
    %537 = vmatpush1.msra.mxu0 0.0
    %538 = vmatprep.subr.mxu0 0.0
    %539 = vmatpush1.msra.mxu0 0.0
    %540 = vmatprep.subr.mxu0 0.0
    %541 = vmatpush1.msra.mxu0 0.0
    %542 = vmatprep.subr.mxu0 0.0
    %543 = vmatpush1.msra.mxu0 0.0
    %544 = vmatprep.subr.mxu0 0.0
    %545 = vmatpush1.msra.mxu0 0.0
    %546 = vmatprep.subr.mxu0 0.0
    %547 = vmatpush1.msra.mxu0 0.0
    %548 = vmatprep.subr.mxu0 0.0
    %549 = vmatpush1.msra.mxu0 0.0
    %550 = vmatprep.subr.mxu0 0.0
    %551 = vmatpush1.msra.mxu0 0.0
    %552 = vmatprep.subr.mxu0 0.0
    %553 = vmatpush1.msra.mxu0 0.0
    %554 = vmatprep.subr.mxu0 0.0
    %555 = vmatpush1.msra.mxu0 0.0
    %556 = vmatprep.subr.mxu0 0.0
    %557 = vmatpush1.msra.mxu0 0.0
    %558 = vmatprep.subr.mxu0 0.0
    %559 = vmatpush1.msra.mxu0 0.0
    %560 = vmatprep.subr.mxu0 0.0
    %561 = vmatpush1.msra.mxu0 0.0
    %562 = vmatprep.subr.mxu0 0.0
    %563 = vmatpush1.msra.mxu0 0.0
    %564 = vmatprep.subr.mxu0 0.0
    %565 = vmatpush1.msra.mxu0 0.0
    %566 = vmatprep.subr.mxu0 0.0
    %567 = vmatpush1.msra.mxu0 0.0
    %568 = vmatprep.subr.mxu0 0.0
    %569 = vmatpush1.msra.mxu0 0.0
    %570 = vmatprep.subr.mxu0 0.0
    %571 = vmatpush1.msra.mxu0 0.0
    %572 = vmatprep.subr.mxu0 0.0
    %573 = vmatpush1.msra.mxu0 0.0
    %574 = vmatprep.subr.mxu0 0.0
    %575 = vmatpush1.msra.mxu0 0.0
    %576 = vmatprep.subr.mxu0 0.0
    %577 = vmatpush1.msra.mxu0 0.0
    %578 = vmatprep.subr.mxu0 0.0
    %579 = vmatpush1.msra.mxu0 0.0
    %580 = vmatprep.subr.mxu0 0.0
    %581 = vmatpush1.msra.mxu0 0.0
    %582 = vmatprep.subr.mxu0 0.0
    %583 = vmatpush1.msra.mxu0 0.0
    %584 = vmatprep.subr.mxu0 0.0
    %585 = vmatpush1.msra.mxu0 0.0
    %586 = vmatprep.subr.mxu0 0.0
    %587 = vmatpush1.msra.mxu0 0.0
    %588 = vmatprep.subr.mxu0 0.0
    %589 = vmatpush1.msra.mxu0 0.0
    %590 = vmatprep.subr.mxu0 0.0
    %591 = vmatpush1.msra.mxu0 0.0
    %592 = vmatprep.subr.mxu0 0.0
    %593 = vmatpush1.msra.mxu0 0.0
    %594 = vmatprep.subr.mxu0 0.0
    %595 = vmatpush1.msra.mxu0 0.0
    %596 = vmatprep.mubr.f32.mxu0 0.0
    %597 = vmatmul.mubr.f32.gmra.mrb[0].mxu0 %v527
    %v598 = vpop.f32.mrb[0].mxu0
    %v599 = vadd.f32 0.0, %v598
    %v600 = vpop.f32.mrb[0].mxu0
    %601 = vmatprep.mubr.f32.mxu0 0.0
    %602 = vmatmul.mubr.f32.gmra.mrb[0].mxu0 %v530
    %v603 = vpop.f32.mrb[0].mxu0
    %v604 = vadd.f32 0.0, %v603
    %v605 = vpop.f32.mrb[0].mxu0
    %606 = vdwg.mxu0
    %v607 = vrcp.pop %v522
    %v608 = vrcp.pop %v525
    %v609 = vmul.f32 %v522, %v607
    %v610 = vmul.f32 %v525, %v608
    %v611 = vsub.f32 2.0, %v609
    %v612 = vsub.f32 2.0, %v610
    %v613 = vmul.f32 %v607, %v611
    %v614 = vmul.f32 %v608, %v612
    %v615 = vmul.f32 %v599, %v613
    %v616 = vmul.f32 %v604, %v614
    %vm617 = vcmp.gt.f32.partialorder %v615, 0.0
    %vm618 = vcmp.gt.f32.partialorder %v616, 0.0
    %v619 = vmul.f32 %v615, 1.442695
    %v620 = vpow.pop %v619
    %v621 = vmul.f32 %v616, 1.442695
    %v622 = vpow.pop %v621
    %v623 = vsub.f32 %v620, 1.0
    %v624 = vsub.f32 %v622, 1.0
    %v625 = vsel %vm617, %v615, %v623
    %v626 = vsel %vm618, %v616, %v624
    %s627 = scalar_lea.vmem [#allocation3], 16
    %628 = vst [vmem:[%s627] sm:$0xff] %v625
    %629 = vst [vmem:[%s627 + $0x8] sm:$0xff] %v626
    // Predicated region
    $region26: #{tpu_custom_call.1} parent=1 // pred_check
      _
    $region27: #{tpu_custom_call.1} parent=1 // pred_check_branch
      %631 = sbr.rel (0) target = $region29
    $region28: #{tpu_custom_call.1} parent=1 // pred_region
      %s633 = ssub.s32 512, 512
      %634 = vsyncadd [#allocation4], %s633
      %s635 = sshll.u32 [#allocation3], 4
      %s636 = int_to_ptr.vmem [resolvable:$true] %s635
      %641 = dma.vmem_to_hbm [thread:$0]  %s636, 512, %s6, [#allocation4], 128, 128, 8
    $region29: #{tpu_custom_call.1} parent=1 // pred_fallthru
      _
    // Predicated region
    $region30: #{tpu_custom_call.1} parent=1 // pred_check
      _
    $region31: #{tpu_custom_call.1} parent=1 // pred_check_branch
      %643 = sbr.rel (0) target = $region33
    $region32: #{tpu_custom_call.1} parent=1 // pred_region
      %644 = dma.done [#allocation4], 512
    $region33: #{tpu_custom_call.1} parent=1 // pred_fallthru
      _
    %645 = vsyncpa [#allocation4], 1

</llo_original>
